<compile_context>
chip_gen: v7x
topology: tpu7x:2x2x1
jax: 0.10.0
libtpu: 0.0.40
codegen_flags: <defaults>
</compile_context>

<pallas_src>
import jax
import jax.numpy as jnp
from jax.experimental import pallas as pl
from jax.experimental.pallas import tpu as pltpu

S_DIM, H_DIM = 10, 25
BRANCHES = [1, 2, 3]
NB = len(BRANCHES)

SP = 16                    # padded x width: 10 features + 1 bias lane, -> 16
HP = 128                   # f / h lane width (stage-1 output, stage-2 output)
BLK = 32                   # lane granularity of s/branch blocks inside h
OP = 8                     # packed output lanes (6 useful + 2 pad), f32
OFFS = [0, 1, 3]           # lane offset of each branch inside the output slab

TB = 1024                  # max batch tile for the grid path
GRIDLESS_MAX = 256         # below this, run a single gridless tile


def _dqn_kernel(x_ref, w1_ref, w2_ref, w3_ref, out_ref):
    # 3 matmuls, 2 ReLUs, one narrow f32 store.  bf16 MXU inputs, f32 accum.
    f = jnp.maximum(
        jnp.dot(x_ref[...], w1_ref[...], preferred_element_type=jnp.float32), 0.0)
    h = jnp.maximum(
        jnp.dot(f.astype(jnp.bfloat16), w2_ref[...],
                preferred_element_type=jnp.float32), 0.0)
    out_ref[...] = jnp.dot(h.astype(jnp.bfloat16), w3_ref[...],
                           preferred_element_type=jnp.float32)


def init_params(key):
    """Deterministic PyTorch-Linear-style init (uniform +/- 1/sqrt(fan_in))."""
    def linear(k, fan_in, fan_out):
        k1, k2 = jax.random.split(k)
        bound = 1.0 / float(fan_in) ** 0.5
        w = jax.random.uniform(k1, (fan_out, fan_in), jnp.float32, -bound, bound)
        b = jax.random.uniform(k2, (fan_out,), jnp.float32, -bound, bound)
        return w, b

    keys = jax.random.split(key, 2 + 2 * NB)
    w1, b1 = linear(keys[0], S_DIM, H_DIM)                # shared
    w2, b2 = linear(keys[1], H_DIM, H_DIM)                # shared_state
    wds, bds, wouts, bouts = [], [], [], []
    for i in range(NB):
        wd, bd = linear(keys[2 + 2 * i], H_DIM, H_DIM)            # domains[i]
        wo, bo = linear(keys[3 + 2 * i], 2 * H_DIM, BRANCHES[i])  # outputs[i]
        wds.append(wd); bds.append(bd); wouts.append(wo); bouts.append(bo)
    return (w1, b1, w2, b2, wds, bds, wouts, bouts)


def pack_params(params):
    """Fuse PyTorch-shaped params into 3 small padded bf16 weights.

    Layout:
      W1 (16,128):   rows 0:10 = shared W.T, row 10 = shared bias,
                     [10, 25] = 1.0 regenerates the constant lane in f.
      W2 (128,128):  lanes  0:32  -> shared_state (s)   [+1.0 at (25,25)]
                     lanes 32:64  -> domains[0]
                     lanes 64:96  -> domains[1]
                     lanes 96:128 -> domains[2]
                     row 25 of each block holds that block's bias.
      W3 (128,8):    branch i writes lanes OFFS[i]:OFFS[i]+n_i;
                     rows 0:25 = state-half of Wo_i, row 25 = bias,
                     rows 32*(i+1):32*(i+1)+25 = branch-half of Wo_i.
    """
    w1, b1, w2, b2, wds, bds, wouts, bouts = params

    w1p = jnp.zeros((SP, HP), jnp.float32)
    w1p = w1p.at[:S_DIM, :H_DIM].set(w1.T)
    w1p = w1p.at[S_DIM, :H_DIM].set(b1)
    w1p = w1p.at[S_DIM, H_DIM].set(1.0)          # constant lane into f

    w2p = jnp.zeros((HP, HP), jnp.float32)
    w2p = w2p.at[:H_DIM, :H_DIM].set(w2.T)
    w2p = w2p.at[H_DIM, :H_DIM].set(b2)
    w2p = w2p.at[H_DIM, H_DIM].set(1.0)          # carry the constant lane into h
    for i in range(NB):
        c0 = (i + 1) * BLK
        w2p = w2p.at[:H_DIM, c0:c0 + H_DIM].set(wds[i].T)
        w2p = w2p.at[H_DIM, c0:c0 + H_DIM].set(bds[i])

    # cat([br_i, s]) @ Wo_i.T == br_i @ Wo_i[:, :H].T + s @ Wo_i[:, H:].T
    w3p = jnp.zeros((HP, OP), jnp.float32)
    for i in range(NB):
        n, off = BRANCHES[i], OFFS[i]
        w_out = wouts[i]                                          # (n, 2*H_DIM)
        w3p = w3p.at[:H_DIM, off:off + n].set(w_out[:, H_DIM:].T)   # state half
        w3p = w3p.at[H_DIM, off:off + n].set(bouts[i])              # bias row
        r0 = (i + 1) * BLK
        w3p = w3p.at[r0:r0 + H_DIM, off:off + n].set(w_out[:, :H_DIM].T)

    return (w1p.astype(jnp.bfloat16),
            w2p.astype(jnp.bfloat16),
            w3p.astype(jnp.bfloat16))


def _round_up(v, m):
    return ((v + m - 1) // m) * m


def dqn_ab_pallas(x, packed):
    w1p, w2p, w3p = packed
    B = x.shape[0]

    # Narrow bf16 input: [features | 1.0 bias lane | zero pad] -> (B, 16).
    x16 = jnp.concatenate(
        [x.astype(jnp.bfloat16),
         jnp.ones((B, 1), jnp.bfloat16),
         jnp.zeros((B, SP - S_DIM - 1), jnp.bfloat16)], axis=1)

    if B <= GRIDLESS_MAX:
        # Gridless: whole problem is a single small tile; no grid machinery.
        BP = max(16, _round_up(B, 16))
        xp = jnp.pad(x16, ((0, BP - B), (0, 0)))
        out = pl.pallas_call(
            _dqn_kernel,
            out_shape=jax.ShapeDtypeStruct((BP, OP), jnp.float32),
        )(xp, w1p, w2p, w3p)
    else:
        # Grid path: >= 2 "parallel" steps (dual-TC on v7x), tiles are
        # multiples of 256, capped at TB.
        n_steps = max(2, -(-B // TB))
        tile = _round_up(-(-B // n_steps), 256)
        BP = tile * n_steps
        xp = jnp.pad(x16, ((0, BP - B), (0, 0)))
        out = pl.pallas_call(
            _dqn_kernel,
            out_shape=jax.ShapeDtypeStruct((BP, OP), jnp.float32),
            grid=(n_steps,),
            in_specs=[
                pl.BlockSpec((tile, SP), lambda i: (i, 0)),
                pl.BlockSpec((SP, HP), lambda i: (0, 0)),   # weights resident
                pl.BlockSpec((HP, HP), lambda i: (0, 0)),
                pl.BlockSpec((HP, OP), lambda i: (0, 0)),
            ],
            out_specs=pl.BlockSpec((tile, OP), lambda i: (i, 0)),
            compiler_params=pltpu.CompilerParams(
                dimension_semantics=("parallel",)),
        )(xp, w1p, w2p, w3p)

    # Slice the packed narrow slab into per-branch outputs, as in PyTorch.
    return [out[:B, OFFS[i]:OFFS[i] + BRANCHES[i]] for i in range(NB)]


def dqn_ab_reference(x, params):
    """Pure-JAX f32 reference matching the PyTorch forward exactly."""
    w1, b1, w2, b2, wds, bds, wouts, bouts = params
    f = jax.nn.relu(x @ w1.T + b1)
    s = jax.nn.relu(f @ w2.T + b2)
    outs = []
    for i in range(NB):
        br = jax.nn.relu(f @ wds[i].T + bds[i])
        cat = jnp.concatenate([br, s], axis=1)
        outs.append(cat @ wouts[i].T + bouts[i])
    return outs


def dqn_ab_reference_mixed(x, params):
    """Same forward, mirroring the kernel's precision policy:
    bf16-stored params / bf16 activation storage, f32 math & accumulation."""
    def q(a):
        return a.astype(jnp.bfloat16).astype(jnp.float32)
    w1, b1, w2, b2, wds, bds, wouts, bouts = params
    xq = q(x)
    f = q(jax.nn.relu(xq @ q(w1).T + q(b1)))
    s = q(jax.nn.relu(f @ q(w2).T + q(b2)))
    outs = []
    for i in range(NB):
        br = q(jax.nn.relu(f @ q(wds[i]).T + q(bds[i])))
        cat = jnp.concatenate([br, s], axis=1)
        outs.append(cat @ q(wouts[i]).T + q(bouts[i]))
    return outs


if __name__ == "__main__":
    key = jax.random.PRNGKey(0)
    kp, kx1, kx2 = jax.random.split(key, 3)

    params = init_params(kp)
    packed = pack_params(params)

    def check(x):
        outs = dqn_ab_pallas(x, packed)
        outs = [jax.block_until_ready(o) for o in outs]
        refs_mp = dqn_ab_reference_mixed(x, params)   # same precision policy
        refs_fp = dqn_ab_reference(x, params)         # exact f32 PyTorch math
        B = x.shape[0]
        for i, (o, rm, rf) in enumerate(zip(outs, refs_mp, refs_fp)):
            assert o.shape == (B, BRANCHES[i]), (o.shape, (B, BRANCHES[i]))
            assert jnp.allclose(o, rm, atol=2e-3, rtol=2e-3), \
                f"branch {i}: mixed-precision mirror mismatch"
            assert jnp.allclose(o, rf, atol=5e-2, rtol=5e-2), \
                f"branch {i}: f32 reference mismatch"

    # Small batch -> gridless single-tile path.
    check(jax.random.normal(kx1, (4, S_DIM), jnp.float32))
    # Larger batch -> batch-tiled "parallel" grid path (2 steps of 256).
    check(jax.random.normal(kx2, (300, S_DIM), jnp.float32))

    print("KERNEL_OK")
</pallas_src>

<mosaic_0001>
module attributes {stable_mosaic.version = 11 : i64} {
  func.func @_dqn_kernel(%arg0: memref<16x16xbf16, #tpu.memory_space<vmem>>, %arg1: memref<16x128xbf16, #tpu.memory_space<vmem>>, %arg2: memref<128x128xbf16, #tpu.memory_space<vmem>>, %arg3: memref<128x8xbf16, #tpu.memory_space<vmem>>, %arg4: memref<16x8xf32, #tpu.memory_space<vmem>>) attributes {dimension_semantics = [], scalar_prefetch = 0 : i64, scratch_operands = 0 : i64, tpu.core_type = #tpu.core_type<tc>} {
    %c0 = arith.constant 0 : index
    %c0_0 = arith.constant 0 : index
    %0 = vector.load %arg0[%c0, %c0_0] : memref<16x16xbf16, #tpu.memory_space<vmem>>, vector<16x16xbf16>
    %c0_1 = arith.constant 0 : index
    %c0_2 = arith.constant 0 : index
    %1 = vector.load %arg1[%c0_1, %c0_2] : memref<16x128xbf16, #tpu.memory_space<vmem>>, vector<16x128xbf16>
    %cst = arith.constant dense<0.000000e+00> : vector<16x128xf32>
    %2 = tpu.matmul %0, %1, %cst {dimension_numbers = #tpu.dot_dimension_numbers<[1], [0], [0], [1], [0, 0, 1, 1], [], []>} : vector<16x16xbf16>, vector<16x128xbf16>, vector<16x128xf32> -> vector<16x128xf32>
    %cst_3 = arith.constant 0.000000e+00 : f32
    %3 = vector.broadcast %cst_3 : f32 to vector<16x128xf32>
    %4 = arith.maximumf %2, %3 : vector<16x128xf32>
    %5 = arith.truncf %4 : vector<16x128xf32> to vector<16x128xbf16>
    %c0_4 = arith.constant 0 : index
    %c0_5 = arith.constant 0 : index
    %6 = vector.load %arg2[%c0_4, %c0_5] : memref<128x128xbf16, #tpu.memory_space<vmem>>, vector<128x128xbf16>
    %cst_6 = arith.constant dense<0.000000e+00> : vector<16x128xf32>
    %7 = tpu.matmul %5, %6, %cst_6 {dimension_numbers = #tpu.dot_dimension_numbers<[1], [0], [0], [1], [0, 0, 1, 1], [], []>} : vector<16x128xbf16>, vector<128x128xbf16>, vector<16x128xf32> -> vector<16x128xf32>
    %cst_7 = arith.constant 0.000000e+00 : f32
    %8 = vector.broadcast %cst_7 : f32 to vector<16x128xf32>
    %9 = arith.maximumf %7, %8 : vector<16x128xf32>
    %10 = arith.truncf %9 : vector<16x128xf32> to vector<16x128xbf16>
    %c0_8 = arith.constant 0 : index
    %c0_9 = arith.constant 0 : index
    %11 = vector.load %arg3[%c0_8, %c0_9] : memref<128x8xbf16, #tpu.memory_space<vmem>>, vector<128x8xbf16>
    %cst_10 = arith.constant dense<0.000000e+00> : vector<16x8xf32>
    %12 = tpu.matmul %10, %11, %cst_10 {dimension_numbers = #tpu.dot_dimension_numbers<[1], [0], [0], [1], [0, 0, 1, 1], [], []>} : vector<16x128xbf16>, vector<128x8xbf16>, vector<16x8xf32> -> vector<16x8xf32>
    %c0_11 = arith.constant 0 : index
    %c0_12 = arith.constant 0 : index
    %13 = vector.load %arg4[%c0_11, %c0_12] : memref<16x8xf32, #tpu.memory_space<vmem>>, vector<16x8xf32>
    tpu.vector_store %arg4[%c0_11, %c0_12], %12 {strides = array<i32>} : memref<16x8xf32, #tpu.memory_space<vmem>>, vector<16x8xf32>,
    return
  }
}

</mosaic_0001>

<llo_original>
// kernel: tpu_custom_call.1
$region0: #{tpu_custom_call.1}
  #allocation0 [shape = 'u32[]', space=smem, size = 0x4, offset = 0x4, fixed_abs, tag = 'smem constant byte address 0x4 - core index']
  #allocation1 [shape = 'u32[144,128]{1,0:T(1,128)}', space=vmem, size = 0x12000, scoped, tag = 'internal scratch']
  %s0 = inlined_call_operand.vmem [shape: bf16[16,16], index: 0, kind: input, shape index: {}]
  %s1 = inlined_call_operand.hbm [shape: bf16[16,128], index: 1, kind: input, shape index: {}]
  %s2 = inlined_call_operand.vmem [shape: bf16[128,128], index: 2, kind: input, shape index: {}]
  %s3 = inlined_call_operand.vmem [shape: bf16[128,8], index: 3, kind: input, shape index: {}]
  %s4 = inlined_call_operand.vmem [shape: f32[16,8], index: 4, kind: output, shape index: {}]
  %s5 = sld [smem:[#allocation0]]
  $region30: #{tpu_custom_call.1} parent=0
    _
  %s7 = ssub.s32 1, %s5
  %s8 = scalar_select 0, %s7, %s5
  $region1: #{tpu_custom_call.1} parent=0
    #allocation2 [shape = 'u8[4096]{0}', space=vmem, size = 0x1000, scoped, tag = 'input window, operand 1, single buffered']
    #allocation3 [shape = 's32[1]{0}', space=sflag, size = 0x4, scoped, tag = 'scoped memory for tpu_custom_call.1']
    %9 = vsyncpa [#allocation3], 0
    // Predicated region
    $region2: #{tpu_custom_call.1} parent=1 // pred_check
      _
    $region3: #{tpu_custom_call.1} parent=1 // pred_check_branch
      %11 = sbr.rel (0) target = $region5
    $region4: #{tpu_custom_call.1} parent=1 // pred_region
      _
    $region5: #{tpu_custom_call.1} parent=1 // pred_fallthru
      _
    // Predicated region
    $region6: #{tpu_custom_call.1} parent=1 // pred_check
      _
    $region7: #{tpu_custom_call.1} parent=1 // pred_check_branch
      %13 = sbr.rel (0) target = $region9
    $region8: #{tpu_custom_call.1} parent=1 // pred_region
      %s15 = ssub.s32 128, 128
      %16 = vsyncadd [#allocation3], %s15
      %s17 = sshll.u32 [#allocation2], 4
      %s18 = int_to_ptr.vmem [resolvable:$true] %s17
      %23 = dma.hbm_to_vmem [thread:$0]  %s1, 128, %s18, [#allocation3], 64, 64, 4
    $region9: #{tpu_custom_call.1} parent=1 // pred_fallthru
      _
    // Predicated region
    $region10: #{tpu_custom_call.1} parent=1 // pred_check
      _
    $region11: #{tpu_custom_call.1} parent=1 // pred_check_branch
      %25 = sbr.rel (0) target = $region13
    $region12: #{tpu_custom_call.1} parent=1 // pred_region
      _
    $region13: #{tpu_custom_call.1} parent=1 // pred_fallthru
      _
    // Predicated region
    $region14: #{tpu_custom_call.1} parent=1 // pred_check
      _
    $region15: #{tpu_custom_call.1} parent=1 // pred_check_branch
      %27 = sbr.rel (0) target = $region17
    $region16: #{tpu_custom_call.1} parent=1 // pred_region
      _
    $region17: #{tpu_custom_call.1} parent=1 // pred_fallthru
      _
    // Predicated region
    $region18: #{tpu_custom_call.1} parent=1 // pred_check
      _
    $region19: #{tpu_custom_call.1} parent=1 // pred_check_branch
      %29 = sbr.rel (0) target = $region21
    $region20: #{tpu_custom_call.1} parent=1 // pred_region
      %30 = dma.done [#allocation3], 128
    $region21: #{tpu_custom_call.1} parent=1 // pred_fallthru
      _
    %v32 = vld [vmem:[%s0] sm:$0xf]
    %v33 = vld [vmem:[%s0 + $0x4] sm:$0xf]
    %v34 = vld [vmem:[#allocation2] sm:$0xf]
    %v35 = vld [vmem:[#allocation2 + $0x4] sm:$0xf]
    %v38 = vunpack.c.l.b16 %v32
    %v39 = vunpack.c.l.b16 %v33
    %v40 = vpack.c.b16 %v39, %v38
    %v43 = vunpack.c.l.b16 %v34
    %v44 = vunpack.c.l.b16 %v35
    %v45 = vpack.c.b16 %v44, %v43
    %vm47 = vcmask 130048
    %v49 = vsel %vm47, %v40, 0
    %51 = vmatprep.subr.bf16.mxu0 0
    %52 = vmatpush1.bf16.msra.mxu0 %v45
    %53 = vmatprep.subr.bf16.mxu0 0
    %54 = vmatpush1.bf16.msra.mxu0 0
    %55 = vmatprep.subr.bf16.mxu0 0
    %56 = vmatpush1.bf16.msra.mxu0 0
    %57 = vmatprep.subr.bf16.mxu0 0
    %58 = vmatpush1.bf16.msra.mxu0 0
    %59 = vmatprep.subr.bf16.mxu0 0
    %60 = vmatpush1.bf16.msra.mxu0 0
    %61 = vmatprep.subr.bf16.mxu0 0
    %62 = vmatpush1.bf16.msra.mxu0 0
    %63 = vmatprep.subr.bf16.mxu0 0
    %64 = vmatpush1.bf16.msra.mxu0 0
    %65 = vmatprep.subr.bf16.mxu0 0
    %66 = vmatpush1.bf16.msra.mxu0 0
    %67 = vmatprep.subr.bf16.mxu0 0
    %68 = vmatpush1.bf16.msra.mxu0 0
    %69 = vmatprep.subr.bf16.mxu0 0
    %70 = vmatpush1.bf16.msra.mxu0 0
    %71 = vmatprep.subr.bf16.mxu0 0
    %72 = vmatpush1.bf16.msra.mxu0 0
    %73 = vmatprep.subr.bf16.mxu0 0
    %74 = vmatpush1.bf16.msra.mxu0 0
    %75 = vmatprep.subr.bf16.mxu0 0
    %76 = vmatpush1.bf16.msra.mxu0 0
    %77 = vmatprep.subr.bf16.mxu0 0
    %78 = vmatpush1.bf16.msra.mxu0 0
    %79 = vmatprep.subr.bf16.mxu0 0
    %80 = vmatpush1.bf16.msra.mxu0 0
    %81 = vmatprep.subr.bf16.mxu0 0
    %82 = vmatpush1.bf16.msra.mxu0 0
    %83 = vmatprep.mubr.bf16.mxu0 0
    %84 = vmatmul.mubr.bf16.gmra.mrb[0].mxu0 %v49
    %v85 = vpop.f32.mrb[0].mxu0
    %v86 = vadd.f32 0.0, %v85
    %v87 = vpop.f32.mrb[0].mxu0
    %v88 = vpop.f32.mrb[0].mxu0
    %v89 = vadd.f32 0.0, %v88
    %v90 = vpop.f32.mrb[0].mxu0
    %91 = vdwg.mxu0
    %v92 = vmax.f32 %v86, 0.0
    %v93 = vmax.f32 %v89, 0.0
    %v94 = vpack.c.bf16 %v93, %v92
    %v95 = vld [vmem:[%s2] sm:$0xf]
    %v96 = vld [vmem:[%s2 + $0x4] sm:$0xf]
    %v97 = vld [vmem:[%s2 + $0x8] sm:$0xf]
    %v98 = vld [vmem:[%s2 + $0xc] sm:$0xf]
    %v99 = vld [vmem:[%s2 + $0x10] sm:$0xf]
    %v100 = vld [vmem:[%s2 + $0x14] sm:$0xf]
    %v101 = vld [vmem:[%s2 + $0x18] sm:$0xf]
    %v102 = vld [vmem:[%s2 + $0x1c] sm:$0xf]
    %v103 = vld [vmem:[%s2 + $0x20] sm:$0xf]
    %v104 = vld [vmem:[%s2 + $0x24] sm:$0xf]
    %v105 = vld [vmem:[%s2 + $0x28] sm:$0xf]
    %v106 = vld [vmem:[%s2 + $0x2c] sm:$0xf]
    %v107 = vld [vmem:[%s2 + $0x30] sm:$0xf]
    %v108 = vld [vmem:[%s2 + $0x34] sm:$0xf]
    %v109 = vld [vmem:[%s2 + $0x38] sm:$0xf]
    %v110 = vld [vmem:[%s2 + $0x3c] sm:$0xf]
    %v127 = vunpack.c.l.b16 %v95
    %v128 = vunpack.c.l.b16 %v96
    %v129 = vunpack.c.l.b16 %v97
    %v130 = vunpack.c.l.b16 %v98
    %v131 = vunpack.c.l.b16 %v99
    %v132 = vunpack.c.l.b16 %v100
    %v133 = vunpack.c.l.b16 %v101
    %v134 = vunpack.c.l.b16 %v102
    %v135 = vunpack.c.l.b16 %v103
    %v136 = vunpack.c.l.b16 %v104
    %v137 = vunpack.c.l.b16 %v105
    %v138 = vunpack.c.l.b16 %v106
    %v139 = vunpack.c.l.b16 %v107
    %v140 = vunpack.c.l.b16 %v108
    %v141 = vunpack.c.l.b16 %v109
    %v142 = vunpack.c.l.b16 %v110
    %v143 = vpack.c.b16 %v128, %v127
    %v144 = vpack.c.b16 %v130, %v129
    %v145 = vpack.c.b16 %v132, %v131
    %v146 = vpack.c.b16 %v134, %v133
    %v147 = vpack.c.b16 %v136, %v135
    %v148 = vpack.c.b16 %v138, %v137
    %v149 = vpack.c.b16 %v140, %v139
    %v150 = vpack.c.b16 %v142, %v141
    %159 = vmatprep.subr.bf16.mxu0 0
    %160 = vmatpush1.bf16.msra.mxu0 %v143
    %161 = vmatprep.subr.bf16.mxu0 0
    %162 = vmatpush1.bf16.msra.mxu0 %v144
    %163 = vmatprep.subr.bf16.mxu0 0
    %164 = vmatpush1.bf16.msra.mxu0 %v145
    %165 = vmatprep.subr.bf16.mxu0 0
    %166 = vmatpush1.bf16.msra.mxu0 %v146
    %167 = vmatprep.subr.bf16.mxu0 0
    %168 = vmatpush1.bf16.msra.mxu0 %v147
    %169 = vmatprep.subr.bf16.mxu0 0
    %170 = vmatpush1.bf16.msra.mxu0 %v148
    %171 = vmatprep.subr.bf16.mxu0 0
    %172 = vmatpush1.bf16.msra.mxu0 %v149
    %173 = vmatprep.subr.bf16.mxu0 0
    %174 = vmatpush1.bf16.msra.mxu0 %v150
    %175 = vmatprep.subr.bf16.mxu0 0
    %176 = vmatpush1.bf16.msra.mxu0 0
    %177 = vmatprep.subr.bf16.mxu0 0
    %178 = vmatpush1.bf16.msra.mxu0 0
    %179 = vmatprep.subr.bf16.mxu0 0
    %180 = vmatpush1.bf16.msra.mxu0 0
    %181 = vmatprep.subr.bf16.mxu0 0
    %182 = vmatpush1.bf16.msra.mxu0 0
    %183 = vmatprep.subr.bf16.mxu0 0
    %184 = vmatpush1.bf16.msra.mxu0 0
    %185 = vmatprep.subr.bf16.mxu0 0
    %186 = vmatpush1.bf16.msra.mxu0 0
    %187 = vmatprep.subr.bf16.mxu0 0
    %188 = vmatpush1.bf16.msra.mxu0 0
    %189 = vmatprep.subr.bf16.mxu0 0
    %190 = vmatpush1.bf16.msra.mxu0 0
    %191 = vmatprep.mubr.bf16.mxu0 0
    %192 = vmatmul.mubr.bf16.gmra.mrb[0].mxu0 %v94
    %v193 = vpop.f32.mrb[0].mxu0
    %v194 = vadd.f32 0.0, %v193
    %v195 = vpop.f32.mrb[0].mxu0
    %v196 = vpop.f32.mrb[0].mxu0
    %v197 = vadd.f32 0.0, %v196
    %v198 = vpop.f32.mrb[0].mxu0
    %199 = vdwg.mxu0
    %v200 = vmax.f32 %v194, 0.0
    %v201 = vmax.f32 %v197, 0.0
    %v202 = vpack.c.bf16 %v201, %v200
    %v203 = vld [vmem:[%s3] sm:$0xf]
    %v204 = vld [vmem:[%s3 + $0x4] sm:$0xf]
    %v205 = vld [vmem:[%s3 + $0x8] sm:$0xf]
    %v206 = vld [vmem:[%s3 + $0xc] sm:$0xf]
    %v207 = vld [vmem:[%s3 + $0x10] sm:$0xf]
    %v208 = vld [vmem:[%s3 + $0x14] sm:$0xf]
    %v209 = vld [vmem:[%s3 + $0x18] sm:$0xf]
    %v210 = vld [vmem:[%s3 + $0x1c] sm:$0xf]
    %v211 = vld [vmem:[%s3 + $0x20] sm:$0xf]
    %v212 = vld [vmem:[%s3 + $0x24] sm:$0xf]
    %v213 = vld [vmem:[%s3 + $0x28] sm:$0xf]
    %v214 = vld [vmem:[%s3 + $0x2c] sm:$0xf]
    %v215 = vld [vmem:[%s3 + $0x30] sm:$0xf]
    %v216 = vld [vmem:[%s3 + $0x34] sm:$0xf]
    %v217 = vld [vmem:[%s3 + $0x38] sm:$0xf]
    %v218 = vld [vmem:[%s3 + $0x3c] sm:$0xf]
    %v235 = vunpack.c.l.b16 %v203
    %v236 = vunpack.c.l.b16 %v204
    %v237 = vunpack.c.l.b16 %v205
    %v238 = vunpack.c.l.b16 %v206
    %v239 = vunpack.c.l.b16 %v207
    %v240 = vunpack.c.l.b16 %v208
    %v241 = vunpack.c.l.b16 %v209
    %v242 = vunpack.c.l.b16 %v210
    %v243 = vunpack.c.l.b16 %v211
    %v244 = vunpack.c.l.b16 %v212
    %v245 = vunpack.c.l.b16 %v213
    %v246 = vunpack.c.l.b16 %v214
    %v247 = vunpack.c.l.b16 %v215
    %v248 = vunpack.c.l.b16 %v216
    %v249 = vunpack.c.l.b16 %v217
    %v250 = vunpack.c.l.b16 %v218
    %v251 = vpack.c.b16 %v236, %v235
    %v252 = vpack.c.b16 %v238, %v237
    %v253 = vpack.c.b16 %v240, %v239
    %v254 = vpack.c.b16 %v242, %v241
    %v255 = vpack.c.b16 %v244, %v243
    %v256 = vpack.c.b16 %v246, %v245
    %v257 = vpack.c.b16 %v248, %v247
    %v258 = vpack.c.b16 %v250, %v249
    %267 = vmatprep.subr.bf16.mxu0 0
    %268 = vmatpush1.bf16.msra.mxu0 %v251
    %269 = vmatprep.subr.bf16.mxu0 0
    %270 = vmatpush1.bf16.msra.mxu0 %v252
    %271 = vmatprep.subr.bf16.mxu0 0
    %272 = vmatpush1.bf16.msra.mxu0 %v253
    %273 = vmatprep.subr.bf16.mxu0 0
    %274 = vmatpush1.bf16.msra.mxu0 %v254
    %275 = vmatprep.subr.bf16.mxu0 0
    %276 = vmatpush1.bf16.msra.mxu0 %v255
    %277 = vmatprep.subr.bf16.mxu0 0
    %278 = vmatpush1.bf16.msra.mxu0 %v256
    %279 = vmatprep.subr.bf16.mxu0 0
    %280 = vmatpush1.bf16.msra.mxu0 %v257
    %281 = vmatprep.subr.bf16.mxu0 0
    %282 = vmatpush1.bf16.msra.mxu0 %v258
    %283 = vmatprep.subr.bf16.mxu0 0
    %284 = vmatpush1.bf16.msra.mxu0 0
    %285 = vmatprep.subr.bf16.mxu0 0
    %286 = vmatpush1.bf16.msra.mxu0 0
    %287 = vmatprep.subr.bf16.mxu0 0
    %288 = vmatpush1.bf16.msra.mxu0 0
    %289 = vmatprep.subr.bf16.mxu0 0
    %290 = vmatpush1.bf16.msra.mxu0 0
    %291 = vmatprep.subr.bf16.mxu0 0
    %292 = vmatpush1.bf16.msra.mxu0 0
    %293 = vmatprep.subr.bf16.mxu0 0
    %294 = vmatpush1.bf16.msra.mxu0 0
    %295 = vmatprep.subr.bf16.mxu0 0
    %296 = vmatpush1.bf16.msra.mxu0 0
    %297 = vmatprep.subr.bf16.mxu0 0
    %298 = vmatpush1.bf16.msra.mxu0 0
    %299 = vmatprep.mubr.bf16.mxu0 0
    %300 = vmatmul.mubr.bf16.gmra.mrb[0].mxu0 %v202
    %v301 = vpop.f32.mrb[0].mxu0
    %v302 = vadd.f32 0.0, %v301
    %v303 = vpop.f32.mrb[0].mxu0
    %v304 = vpop.f32.mrb[0].mxu0
    %v305 = vadd.f32 0.0, %v304
    %v306 = vpop.f32.mrb[0].mxu0
    %307 = vdwg.mxu0
    %vm308 = vcmask 64512
    %309 = vst.msk [vmem:[%s4] sm:$0xff] %vm308, %v302
    %310 = vst.msk [vmem:[%s4 + $0x8] sm:$0xff] %vm308, %v305
    // Predicated region
    $region22: #{tpu_custom_call.1} parent=1 // pred_check
      _
    $region23: #{tpu_custom_call.1} parent=1 // pred_check_branch
      %312 = sbr.rel (0) target = $region25
    $region24: #{tpu_custom_call.1} parent=1 // pred_region
      _
    $region25: #{tpu_custom_call.1} parent=1 // pred_fallthru
      _
    // Predicated region
    $region26: #{tpu_custom_call.1} parent=1 // pred_check
      _
    $region27: #{tpu_custom_call.1} parent=1 // pred_check_branch
      %314 = sbr.rel (0) target = $region29
    $region28: #{tpu_custom_call.1} parent=1 // pred_region
      _
    $region29: #{tpu_custom_call.1} parent=1 // pred_fallthru
      _
    %315 = vsyncpa [#allocation3], 1

</llo_original>
